<compile_context>
chip_gen: v7x
topology: tpu7x:2x2x1
jax: 0.10.0
libtpu: 0.0.40
codegen_flags: <defaults>
</compile_context>

<pallas_src>
import jax
import jax.numpy as jnp
from jax.experimental import pallas as pl
from jax.experimental.pallas import tpu as pltpu

QN = -128.0   # 8-bit signed quantization range
QP = 127.0


def _tensorcores_per_chip():
    """v7x has 2 TensorCores per chip; v5e/v6e have 1 (grid steps are serial)."""
    try:
        kind = jax.devices()[0].device_kind.lower()
    except Exception:
        return 1
    return 2 if ("v7" in kind or "7x" in kind) else 1


def _make_lsq_er_kernel(nb, cout, cin, hw):
    """Fused float+LSQ 1x1-conv kernel; one grid step processes `nb` images."""

    def kernel(scal_ref, x_ref, wb_ref, yf_ref, yl_ref, xs_ref):
        # scal_ref: SMEM f32[1] = [1/s_a]
        inv_sa = scal_ref[0]

        # Packed parameters: (2*Cout, 2*Cin+1); last lane column = stacked bias.
        w = wb_ref[:, : 2 * cin]                  # block-diagonal weight (16, 8)
        b = wb_ref[:, 2 * cin : 2 * cin + 1]      # stacked bias         (16, 1)

        # Build the sublane-stacked operand [x ; xq_bar] for all nb images,
        # side by side on the lane axis -> (2*Cin, nb*HW), one MXU issue.
        for i in range(nb):
            x = x_ref[i]                                           # (Cin, HW)
            xq_bar = jnp.clip(jnp.round(x * inv_sa), QN, QP)       # fake-quant (VPU)
            xs_ref[0:cin, i * hw:(i + 1) * hw] = x
            xs_ref[cin:2 * cin, i * hw:(i + 1) * hw] = xq_bar

        # Single fused matmul + one broadcast bias add.
        y = jnp.dot(w, xs_ref[...], preferred_element_type=jnp.float32) + b

        # Rows 0:Cout -> float branch, Cout:2*Cout -> LSQ branch (lane-dense stores).
        for i in range(nb):
            yi = y[:, i * hw:(i + 1) * hw]                         # (2*Cout, HW)
            yf_ref[i] = yi[:cout, :]
            yl_ref[i] = yi[cout:, :]

    return kernel


def lsq_er_forward(x_nchw, params, state):
    """Returns (output_float_nchw, output_lsq_nchw, mse, new_state)."""
    N, C, H, W = x_nchw.shape
    HW = H * W
    # Pure reshape (no transpose, no extra HBM pass): NCHW -> (N, Cin, H*W).
    x3 = x_nchw.reshape(N, C, HW).astype(jnp.float32)

    wf, bf = params["w_float"], params["b_float"]      # (Cout, Cin), (Cout, 1)
    wl, bl = state["w_lsq"], state["b_lsq"]            # trainable lsq copies
    s_a = jnp.asarray(state["s_a"], jnp.float32)
    s_w = jnp.asarray(state["s_w"], jnp.float32)
    Cout, Cin = wf.shape
    assert Cin == C

    inv_sa = jnp.float32(1.0) / s_a
    inv_sw = jnp.float32(1.0) / s_w

    # Grid-invariant weight fake-quant hoisted out of the kernel (8x4; also
    # reused by the backward pass, so zero extra work).
    wq_bar = jnp.clip(jnp.round(wl * inv_sw), QN, QP)       # (Cout, Cin)
    wq = wq_bar * s_w                                        # de-quantized weight
    wq_scaled = wq * s_a                                     # fold s_a into weight

    # Single packed parameter array: block-diagonal weight + stacked bias column.
    w_big = jnp.zeros((2 * Cout, 2 * Cin + 1), jnp.float32)
    w_big = w_big.at[:Cout, :Cin].set(wf)
    w_big = w_big.at[Cout:, Cin:2 * Cin].set(wq_scaled)
    w_big = w_big.at[:Cout, 2 * Cin].set(bf[:, 0])
    w_big = w_big.at[Cout:, 2 * Cin].set(bl[:, 0])

    scalars = inv_sa.reshape(1)                              # SMEM f32[1]

    # Chip-aware grid: one image per step on dual-TC chips (blocks shard across
    # TensorCores); one collapsed step covering everything on single-TC chips.
    nb = 1 if (_tensorcores_per_chip() >= 2 and N > 1) else N
    grid = (N // nb,)
    # TODO(synk): if N == 1 on a dual-TC chip, split the HW axis into 2 parallel
    # blocks instead so both cores stay fed.

    kernel = _make_lsq_er_kernel(nb, Cout, Cin, HW)

    yf3, yl3 = pl.pallas_call(
        kernel,
        out_shape=(
            jax.ShapeDtypeStruct((N, Cout, HW), jnp.float32),   # float output
            jax.ShapeDtypeStruct((N, Cout, HW), jnp.float32),   # lsq output
        ),
        grid=grid,
        in_specs=[
            pl.BlockSpec(memory_space=pltpu.MemorySpace.SMEM),        # [1/s_a]
            pl.BlockSpec((nb, Cin, HW), lambda n: (n, 0, 0)),         # activations
            pl.BlockSpec((2 * Cout, 2 * Cin + 1), lambda n: (0, 0)),  # packed params
        ],
        out_specs=(
            pl.BlockSpec((nb, Cout, HW), lambda n: (n, 0, 0)),
            pl.BlockSpec((nb, Cout, HW), lambda n: (n, 0, 0)),
        ),
        scratch_shapes=[pltpu.VMEM((2 * Cin, nb * HW), jnp.float32)],  # [x ; xq_bar]
        compiler_params=pltpu.CompilerParams(
            dimension_semantics=("parallel",)),
    )(scalars, x3, w_big)

    # ---------------- loss + STE backward + SGD(momentum, weight_decay) ------
    # MSE / dY fused here (XLA fuses the reduction with the dY elementwise op),
    # replacing the old in-kernel SSE output.
    numel_y = yf3.size
    diff = yl3 - yf3
    mse = jnp.sum(diff * diff) / numel_y
    dY = (2.0 / numel_y) * diff                              # (N, Cout, HW)

    # Recompute quantized activations with the same factorization as the kernel
    # (multiply by inv_sa, round, clip; scale by s_a applied outside the round).
    xq_bar3 = jnp.clip(jnp.round(x3 * inv_sa), QN, QP)       # (N, Cin, HW)
    xhat3 = xq_bar3 * s_a
    # TODO(synk): at production sizes emit dWq/dB/d_sa partials from the kernel
    # epilogue instead of re-reading activation-sized tensors here.

    v_w = wl * inv_sw
    in_range_w = (v_w > QN) & (v_w < QP)

    dWq = jnp.einsum("nok,nck->oc", dY, xhat3)               # (Cout, Cin)
    dXhat = jnp.einsum("nok,oc->nck", dY, wq)                # (N, Cin, HW)
    dB = jnp.sum(dY, axis=(0, 2)).reshape(Cout, 1)           # (Cout, 1)
    dW = dWq * in_range_w.astype(jnp.float32)                # STE through round/clip

    g_w = 1.0 / jnp.sqrt(wl.size * QP)
    g_a = 1.0 / jnp.sqrt(x3.size * QP)
    grad_elem_w = jnp.where(v_w <= QN, QN,
                            jnp.where(v_w >= QP, QP, wq_bar - v_w))
    v_a = x3 * inv_sa
    grad_elem_a = jnp.where(v_a <= QN, QN,
                            jnp.where(v_a >= QP, QP, jnp.round(v_a) - v_a))
    d_sw = jnp.sum(dWq * grad_elem_w) * g_w
    d_sa = jnp.sum(dXhat * grad_elem_a) * g_a

    def sgd(p, g, buf, lr=0.1, momentum=0.9, wd=1e-4):
        d = g + wd * p
        new_buf = momentum * buf + d
        return p - lr * new_buf, new_buf

    new_state = dict(state)
    for name, grad in (("w_lsq", dW), ("b_lsq", dB), ("s_w", d_sw), ("s_a", d_sa)):
        p, buf = state[name], state["mom_" + name]
        new_p, new_buf = sgd(p, grad, buf)
        new_state[name] = new_p
        new_state["mom_" + name] = new_buf
    # TODO(synk): brocolli's lsq_module may register additional trainable params
    # (e.g. per-channel steps / zero points); only the ones above are updated here.

    # (N, Cout, H*W) -> NCHW is a pure reshape (no transpose).
    yf_nchw = yf3.reshape(N, Cout, H, W)
    yl_nchw = yl3.reshape(N, Cout, H, W)

    # LSQER.forward returns output_float (lsq output / state kept for inspection)
    return yf_nchw, yl_nchw, mse, new_state


def init_params_and_state(key, cin=4, cout=8):
    k1, k2 = jax.random.split(key)
    w = (0.1 * jax.random.normal(k1, (cout, cin))).astype(jnp.float32)   # (Cout, Cin)
    b = (0.1 * jax.random.normal(k2, (cout, 1))).astype(jnp.float32)     # (Cout, 1)
    params = {"w_float": w, "b_float": b}
    # lsq module is initialized from the float module's weights
    s_w = (2.0 * jnp.mean(jnp.abs(w)) / jnp.sqrt(QP)).astype(jnp.float32)
    s_a = jnp.float32(0.05)
    state = {
        "w_lsq": w, "b_lsq": b, "s_w": s_w, "s_a": s_a,
        "mom_w_lsq": jnp.zeros_like(w), "mom_b_lsq": jnp.zeros_like(b),
        "mom_s_w": jnp.zeros_like(s_w), "mom_s_a": jnp.zeros_like(s_a),
    }
    return params, state


if __name__ == "__main__":
    key = jax.random.PRNGKey(0)
    kx, kp = jax.random.split(key)
    x = jax.random.normal(kx, (2, 4, 16, 16), dtype=jnp.float32)   # NCHW

    params, state = init_params_and_state(kp)

    y_float, y_lsq, mse, new_state = lsq_er_forward(x, params, state)
    jax.block_until_ready(y_float)
    jax.block_until_ready(y_lsq)
    jax.block_until_ready(mse)

    # sanity check the float branch against a plain-JAX reference
    N, C, H, W = x.shape
    x3 = x.reshape(N, C, H * W)
    y_ref = jnp.einsum("oc,nck->nok", params["w_float"], x3) + params["b_float"][None]
    y_ref = y_ref.reshape(N, -1, H, W)
    assert y_float.shape == (2, 8, 16, 16)
    assert y_lsq.shape == (2, 8, 16, 16)
    assert jnp.allclose(y_float, y_ref, atol=1e-4, rtol=1e-4)
    assert bool(jnp.isfinite(mse))

    print("KERNEL_OK")
</pallas_src>

<mosaic_0001>
module attributes {stable_mosaic.version = 11 : i64} {
  func.func @kernel(%arg0: i32, %arg1: memref<1xf32, #tpu.memory_space<smem>>, %arg2: memref<2x4x256xf32, #tpu.memory_space<vmem>>, %arg3: memref<16x9xf32, #tpu.memory_space<vmem>>, %arg4: memref<2x8x256xf32, #tpu.memory_space<vmem>>, %arg5: memref<2x8x256xf32, #tpu.memory_space<vmem>>, %arg6: memref<8x512xf32, #tpu.memory_space<vmem>>) attributes {dimension_semantics = [#tpu.dimension_semantics<parallel>], iteration_bounds = array<i64: 1>, scalar_prefetch = 0 : i64, scratch_operands = 1 : i64, tpu.core_type = #tpu.core_type<tc>, window_params = [{transform_indices = @transform_0, window_bounds = array<i64: 1>}, {transform_indices = @transform_1, window_bounds = array<i64: 2, 4, 256>}, {pipeline_mode = #tpu.pipeline_mode<synchronous>, transform_indices = @transform_2, window_bounds = array<i64: 16, 9>}, {transform_indices = @transform_3, window_bounds = array<i64: 2, 8, 256>}, {transform_indices = @transform_4, window_bounds = array<i64: 2, 8, 256>}]} {
    %c0 = arith.constant 0 : index
    %0 = memref.load %arg1[%c0] : memref<1xf32, #tpu.memory_space<smem>>
    %c0_0 = arith.constant 0 : index
    %c0_1 = arith.constant 0 : index
    %1 = vector.load %arg3[%c0_0, %c0_1] : memref<16x9xf32, #tpu.memory_space<vmem>>, vector<16x8xf32>
    %c0_2 = arith.constant 0 : index
    %c8 = arith.constant 8 : index
    %2 = vector.load %arg3[%c0_2, %c8] : memref<16x9xf32, #tpu.memory_space<vmem>>, vector<16x1xf32>
    %c0_3 = arith.constant 0 : index
    %c0_4 = arith.constant 0 : index
    %c0_5 = arith.constant 0 : index
    %3 = vector.load %arg2[%c0_3, %c0_4, %c0_5] : memref<2x4x256xf32, #tpu.memory_space<vmem>>, vector<1x4x256xf32>
    %4 = vector.shape_cast %3 : vector<1x4x256xf32> to vector<4x256xf32>
    %5 = vector.broadcast %0 : f32 to vector<4x256xf32>
    %6 = arith.mulf %4, %5 : vector<4x256xf32>
    %7 = math.roundeven %6 : vector<4x256xf32>
    %cst = arith.constant -1.280000e+02 : f32
    %cst_6 = arith.constant 1.270000e+02 : f32
    %8 = vector.broadcast %cst : f32 to vector<4x256xf32>
    %9 = arith.maximumf %8, %7 : vector<4x256xf32>
    %10 = vector.broadcast %cst_6 : f32 to vector<4x256xf32>
    %11 = arith.minimumf %10, %9 : vector<4x256xf32>
    %c0_7 = arith.constant 0 : index
    %c0_8 = arith.constant 0 : index
    %12 = vector.load %arg6[%c0_7, %c0_8] : memref<8x512xf32, #tpu.memory_space<vmem>>, vector<4x256xf32>
    tpu.vector_store %arg6[%c0_7, %c0_8], %4 {strides = array<i32>} : memref<8x512xf32, #tpu.memory_space<vmem>>, vector<4x256xf32>,
    %c4 = arith.constant 4 : index
    %c0_9 = arith.constant 0 : index
    %13 = vector.load %arg6[%c4, %c0_9] : memref<8x512xf32, #tpu.memory_space<vmem>>, vector<4x256xf32>
    tpu.vector_store %arg6[%c4, %c0_9], %11 {strides = array<i32>} : memref<8x512xf32, #tpu.memory_space<vmem>>, vector<4x256xf32>,
    %c1 = arith.constant 1 : index
    %c0_10 = arith.constant 0 : index
    %c0_11 = arith.constant 0 : index
    %14 = vector.load %arg2[%c1, %c0_10, %c0_11] : memref<2x4x256xf32, #tpu.memory_space<vmem>>, vector<1x4x256xf32>
    %15 = vector.shape_cast %14 : vector<1x4x256xf32> to vector<4x256xf32>
    %16 = vector.broadcast %0 : f32 to vector<4x256xf32>
    %17 = arith.mulf %15, %16 : vector<4x256xf32>
    %18 = math.roundeven %17 : vector<4x256xf32>
    %cst_12 = arith.constant -1.280000e+02 : f32
    %cst_13 = arith.constant 1.270000e+02 : f32
    %19 = vector.broadcast %cst_12 : f32 to vector<4x256xf32>
    %20 = arith.maximumf %19, %18 : vector<4x256xf32>
    %21 = vector.broadcast %cst_13 : f32 to vector<4x256xf32>
    %22 = arith.minimumf %21, %20 : vector<4x256xf32>
    %c0_14 = arith.constant 0 : index
    %c256 = arith.constant 256 : index
    %23 = vector.load %arg6[%c0_14, %c256] : memref<8x512xf32, #tpu.memory_space<vmem>>, vector<4x256xf32>
    tpu.vector_store %arg6[%c0_14, %c256], %15 {strides = array<i32>} : memref<8x512xf32, #tpu.memory_space<vmem>>, vector<4x256xf32>,
    %c4_15 = arith.constant 4 : index
    %c256_16 = arith.constant 256 : index
    %24 = vector.load %arg6[%c4_15, %c256_16] : memref<8x512xf32, #tpu.memory_space<vmem>>, vector<4x256xf32>
    tpu.vector_store %arg6[%c4_15, %c256_16], %22 {strides = array<i32>} : memref<8x512xf32, #tpu.memory_space<vmem>>, vector<4x256xf32>,
    %c0_17 = arith.constant 0 : index
    %c0_18 = arith.constant 0 : index
    %25 = vector.load %arg6[%c0_17, %c0_18] : memref<8x512xf32, #tpu.memory_space<vmem>>, vector<8x512xf32>
    %cst_19 = arith.constant dense<0.000000e+00> : vector<16x512xf32>
    %26 = tpu.matmul %1, %25, %cst_19 {dimension_numbers = #tpu.dot_dimension_numbers<[1], [0], [0], [1], [0, 0, 1, 1], [], []>} : vector<16x8xf32>, vector<8x512xf32>, vector<16x512xf32> -> vector<16x512xf32>
    %27 = vector.broadcast %2 : vector<16x1xf32> to vector<16x512xf32>
    %28 = arith.addf %26, %27 : vector<16x512xf32>
    %29 = vector.extract_strided_slice %28 {offsets = [0, 0], sizes = [16, 256], strides = [1, 1]} : vector<16x512xf32> to vector<16x256xf32>
    %30 = vector.extract_strided_slice %29 {offsets = [0, 0], sizes = [8, 256], strides = [1, 1]} : vector<16x256xf32> to vector<8x256xf32>
    %c0_20 = arith.constant 0 : index
    %c0_21 = arith.constant 0 : index
    %c0_22 = arith.constant 0 : index
    %31 = vector.load %arg4[%c0_20, %c0_21, %c0_22] : memref<2x8x256xf32, #tpu.memory_space<vmem>>, vector<1x8x256xf32>
    %32 = vector.shape_cast %31 : vector<1x8x256xf32> to vector<8x256xf32>
    %33 = vector.shape_cast %30 : vector<8x256xf32> to vector<1x8x256xf32>
    tpu.vector_store %arg4[%c0_20, %c0_21, %c0_22], %33 {strides = array<i32>} : memref<2x8x256xf32, #tpu.memory_space<vmem>>, vector<1x8x256xf32>,
    %34 = vector.extract_strided_slice %29 {offsets = [8, 0], sizes = [8, 256], strides = [1, 1]} : vector<16x256xf32> to vector<8x256xf32>
    %c0_23 = arith.constant 0 : index
    %c0_24 = arith.constant 0 : index
    %c0_25 = arith.constant 0 : index
    %35 = vector.load %arg5[%c0_23, %c0_24, %c0_25] : memref<2x8x256xf32, #tpu.memory_space<vmem>>, vector<1x8x256xf32>
    %36 = vector.shape_cast %35 : vector<1x8x256xf32> to vector<8x256xf32>
    %37 = vector.shape_cast %34 : vector<8x256xf32> to vector<1x8x256xf32>
    tpu.vector_store %arg5[%c0_23, %c0_24, %c0_25], %37 {strides = array<i32>} : memref<2x8x256xf32, #tpu.memory_space<vmem>>, vector<1x8x256xf32>,
    %38 = vector.extract_strided_slice %28 {offsets = [0, 256], sizes = [16, 256], strides = [1, 1]} : vector<16x512xf32> to vector<16x256xf32>
    %39 = vector.extract_strided_slice %38 {offsets = [0, 0], sizes = [8, 256], strides = [1, 1]} : vector<16x256xf32> to vector<8x256xf32>
    %c1_26 = arith.constant 1 : index
    %c0_27 = arith.constant 0 : index
    %c0_28 = arith.constant 0 : index
    %40 = vector.load %arg4[%c1_26, %c0_27, %c0_28] : memref<2x8x256xf32, #tpu.memory_space<vmem>>, vector<1x8x256xf32>
    %41 = vector.shape_cast %40 : vector<1x8x256xf32> to vector<8x256xf32>
    %42 = vector.shape_cast %39 : vector<8x256xf32> to vector<1x8x256xf32>
    tpu.vector_store %arg4[%c1_26, %c0_27, %c0_28], %42 {strides = array<i32>} : memref<2x8x256xf32, #tpu.memory_space<vmem>>, vector<1x8x256xf32>,
    %43 = vector.extract_strided_slice %38 {offsets = [8, 0], sizes = [8, 256], strides = [1, 1]} : vector<16x256xf32> to vector<8x256xf32>
    %c1_29 = arith.constant 1 : index
    %c0_30 = arith.constant 0 : index
    %c0_31 = arith.constant 0 : index
    %44 = vector.load %arg5[%c1_29, %c0_30, %c0_31] : memref<2x8x256xf32, #tpu.memory_space<vmem>>, vector<1x8x256xf32>
    %45 = vector.shape_cast %44 : vector<1x8x256xf32> to vector<8x256xf32>
    %46 = vector.shape_cast %43 : vector<8x256xf32> to vector<1x8x256xf32>
    tpu.vector_store %arg5[%c1_29, %c0_30, %c0_31], %46 {strides = array<i32>} : memref<2x8x256xf32, #tpu.memory_space<vmem>>, vector<1x8x256xf32>,
    return
  }
  func.func @transform_0(%arg0: i32) -> i32 {
    %c0_i32 = arith.constant 0 : i32
    %c0_i32_0 = arith.constant 0 : i32
    return %c0_i32 : i32
  }
  func.func @transform_1(%arg0: i32) -> (i32, i32, i32) {
    %c0_i32 = arith.constant 0 : i32
    %c0_i32_0 = arith.constant 0 : i32
    %c0_i32_1 = arith.constant 0 : i32
    return %arg0, %c0_i32, %c0_i32_0 : i32, i32, i32
  }
  func.func @transform_2(%arg0: i32) -> (i32, i32) {
    %c0_i32 = arith.constant 0 : i32
    %c0_i32_0 = arith.constant 0 : i32
    %c0_i32_1 = arith.constant 0 : i32
    return %c0_i32, %c0_i32_0 : i32, i32
  }
  func.func @transform_3(%arg0: i32) -> (i32, i32, i32) {
    %c0_i32 = arith.constant 0 : i32
    %c0_i32_0 = arith.constant 0 : i32
    %c0_i32_1 = arith.constant 0 : i32
    return %arg0, %c0_i32, %c0_i32_0 : i32, i32, i32
  }
  func.func @transform_4(%arg0: i32) -> (i32, i32, i32) {
    %c0_i32 = arith.constant 0 : i32
    %c0_i32_0 = arith.constant 0 : i32
    %c0_i32_1 = arith.constant 0 : i32
    return %arg0, %c0_i32, %c0_i32_0 : i32, i32, i32
  }
}

</mosaic_0001>

<llo_original>
// kernel: tpu_custom_call.1
$region0: #{tpu_custom_call.1}
  #allocation0 [shape = 'u32[]', space=smem, size = 0x4, offset = 0x4, fixed_abs, tag = 'smem constant byte address 0x4 - core index']
  #allocation1 [shape = 'u32[144,128]{1,0:T(1,128)}', space=vmem, size = 0x12000, scoped, tag = 'internal scratch']
  #allocation2 [shape = 'f32[8,512]{1,0:T(8,128)}', space=vmem, size = 0x4000, scoped, tag = 'scratch operand']
  #allocation3 [shape = 'f32[1]{0:T(128)S(6)}', space=smem, size = 0x200, scoped, tag = 'scoped memory for tpu_custom_call.1']
  %s0 = inlined_call_operand.<no memory space> [shape: f32[1], index: 0, kind: input, shape index: {}]
  %s1 = inlined_call_operand.hbm [shape: f32[2,4,256], index: 1, kind: input, shape index: {}]
  %s2 = inlined_call_operand.hbm [shape: f32[16,9], index: 2, kind: input, shape index: {}]
  %s3 = inlined_call_operand.hbm [shape: f32[2,8,256], index: 3, kind: output, shape index: {0}]
  %s4 = inlined_call_operand.hbm [shape: f32[2,8,256], index: 4, kind: output, shape index: {1}]
  %5 = xla_tuple %s3, %s4
  %s6 = sld [smem:[#allocation0]]
  $region38: #{tpu_custom_call.1} parent=0
    _
  %s8 = ssub.s32 1, %s6
  %s9 = scalar_select 0, %s8, %s6
  %10 = sst [smem:[#allocation3]] %s0
  $region1: #{tpu_custom_call.1} parent=0
    #allocation4 [shape = 'u8[8192]{0}', space=vmem, size = 0x2000, scoped, tag = 'input window, operand 1, single buffered']
    #allocation5 [shape = 's32[1]{0}', space=sflag, size = 0x4, scoped, tag = 'scoped memory for tpu_custom_call.1']
    #allocation6 [shape = 's32[1]{0}', space=sflag, size = 0x4, scoped, tag = 'scoped memory for tpu_custom_call.1']
    #allocation7 [shape = 'u8[8192]{0}', space=vmem, size = 0x2000, scoped, tag = 'input window, operand 2, single buffered']
    #allocation8 [shape = 's32[1]{0}', space=sflag, size = 0x4, scoped, tag = 'scoped memory for tpu_custom_call.1']
    #allocation9 [shape = 'u8[16384]{0}', space=vmem, size = 0x4000, scoped, tag = 'output window, operand 0, single buffered']
    #allocation10 [shape = 'u8[16384]{0}', space=vmem, size = 0x4000, scoped, tag = 'output window, operand 1, single buffered']
    #allocation11 [shape = 's32[1]{0}', space=sflag, size = 0x4, scoped, tag = 'scoped memory for tpu_custom_call.1']
    %11 = vsyncpa [#allocation5], 0
    %12 = vsyncpa [#allocation8], 0
    %13 = vsyncpa [#allocation6], 0
    %14 = vsyncpa [#allocation11], 0
    // Predicated region
    $region2: #{tpu_custom_call.1} parent=1 // pred_check
      _
    $region3: #{tpu_custom_call.1} parent=1 // pred_check_branch
      %16 = sbr.rel (0) target = $region5
    $region4: #{tpu_custom_call.1} parent=1 // pred_region
      _
    $region5: #{tpu_custom_call.1} parent=1 // pred_fallthru
      _
    // Predicated region
    $region6: #{tpu_custom_call.1} parent=1 // pred_check
      _
    $region7: #{tpu_custom_call.1} parent=1 // pred_check_branch
      %18 = sbr.rel (0) target = $region9
    $region8: #{tpu_custom_call.1} parent=1 // pred_region
      %s20 = ssub.s32 256, 256
      %21 = vsyncadd [#allocation5], %s20
      %s22 = sshll.u32 [#allocation4], 4
      %s23 = int_to_ptr.vmem [resolvable:$true] %s22
      %28 = dma.hbm_to_vmem [thread:$0]  %s1, 256, %s23, [#allocation5], 128, 128, 8
    $region9: #{tpu_custom_call.1} parent=1 // pred_fallthru
      _
    // Predicated region
    $region10: #{tpu_custom_call.1} parent=1 // pred_check
      _
    $region11: #{tpu_custom_call.1} parent=1 // pred_check_branch
      %30 = sbr.rel (0) target = $region13
    $region12: #{tpu_custom_call.1} parent=1 // pred_region
      %s32 = ssub.s32 256, 256
      %33 = vsyncadd [#allocation8], %s32
      %s34 = sshll.u32 [#allocation7], 4
      %s35 = int_to_ptr.vmem [resolvable:$true] %s34
      %40 = dma.hbm_to_vmem [thread:$0]  %s2, 256, %s35, [#allocation8], 128, 128, 8
    $region13: #{tpu_custom_call.1} parent=1 // pred_fallthru
      _
    // Predicated region
    $region14: #{tpu_custom_call.1} parent=1 // pred_check
      _
    $region15: #{tpu_custom_call.1} parent=1 // pred_check_branch
      %42 = sbr.rel (0) target = $region17
    $region16: #{tpu_custom_call.1} parent=1 // pred_region
      %43 = dma.done [#allocation5], 256
    $region17: #{tpu_custom_call.1} parent=1 // pred_fallthru
      _
    // Predicated region
    $region18: #{tpu_custom_call.1} parent=1 // pred_check
      _
    $region19: #{tpu_custom_call.1} parent=1 // pred_check_branch
      %45 = sbr.rel (0) target = $region21
    $region20: #{tpu_custom_call.1} parent=1 // pred_region
      %46 = dma.done [#allocation8], 256
    $region21: #{tpu_custom_call.1} parent=1 // pred_fallthru
      _
    %s47 = sld [smem:[#allocation3]]
    %v48 = vld [vmem:[#allocation7] sm:$0xff]
    %v49 = vld [vmem:[#allocation7 + $0x8] sm:$0xff]
    %v50 = vld [vmem:[#allocation4] sm:$0xff]
    %v51 = vstv %s47
    %v52 = vmul.f32 %v50, %v51
    %v53 = vround.ne.pseudo %v52
    %v54 = vmax.f32 %v53, -128.0
    %v55 = vmin.f32 %v54, 127.0
    %v57 = vcombine.high %v50, %v50
    %59 = vst [vmem:[#allocation2] sm:$0xf] %v50
    %60 = vst [vmem:[#allocation2 + $0x8] sm:$0xf] %v57
    %v62 = vcombine.low %v55, %v55
    %64 = vst [vmem:[#allocation2] sm:$0xf0] %v62
    %65 = vst [vmem:[#allocation2 + $0x8] sm:$0xf0] %v55
    %s66 = scalar_lea.vmem [#allocation4], 8
    %v67 = vld [vmem:[%s66] sm:$0xff]
    %v68 = vmul.f32 %v67, %v51
    %v69 = vround.ne.pseudo %v68
    %v70 = vmax.f32 %v69, -128.0
    %v71 = vmin.f32 %v70, 127.0
    %v73 = vcombine.high %v67, %v67
    %75 = vst [vmem:[#allocation2 + $0x10] sm:$0xf] %v67
    %76 = vst [vmem:[#allocation2 + $0x18] sm:$0xf] %v73
    %v78 = vcombine.low %v71, %v71
    %80 = vst [vmem:[#allocation2 + $0x10] sm:$0xf0] %v78
    %81 = vst [vmem:[#allocation2 + $0x18] sm:$0xf0] %v71
    %v82 = vld [vmem:[#allocation2] sm:$0xff]
    %v83 = vld [vmem:[#allocation2 + $0x8] sm:$0xff]
    %v84 = vld [vmem:[#allocation2 + $0x10] sm:$0xff]
    %v85 = vld [vmem:[#allocation2 + $0x18] sm:$0xff]
    %87 = vset.pattern.permute.xlu0 8
    %88 = vperm.xlu0 %87, %v48
    %v89 = vpop.permute.xlu0 %88
    %92 = vset.pattern.permute.xlu0 8
    %93 = vperm.xlu0 %92, %v49
    %v94 = vpop.permute.xlu0 %93
    %vm96 = vcmask 64512
    %v97 = vsel %vm96, %v48, 0
    %v99 = vsel %vm96, %v49, 0
    %101 = vmatprep.subr.mxu0 %v83
    %102 = vmatpush1.msra.mxu0 %v82
    %103 = vmatprep.subr.mxu0 0.0
    %104 = vmatpush1.msra.mxu0 0.0
    %105 = vmatprep.subr.mxu0 0.0
    %106 = vmatpush1.msra.mxu0 0.0
    %107 = vmatprep.subr.mxu0 0.0
    %108 = vmatpush1.msra.mxu0 0.0
    %109 = vmatprep.subr.mxu0 0.0
    %110 = vmatpush1.msra.mxu0 0.0
    %111 = vmatprep.subr.mxu0 0.0
    %112 = vmatpush1.msra.mxu0 0.0
    %113 = vmatprep.subr.mxu0 0.0
    %114 = vmatpush1.msra.mxu0 0.0
    %115 = vmatprep.subr.mxu0 0.0
    %116 = vmatpush1.msra.mxu0 0.0
    %117 = vmatprep.subr.mxu0 0.0
    %118 = vmatpush1.msra.mxu0 0.0
    %119 = vmatprep.subr.mxu0 0.0
    %120 = vmatpush1.msra.mxu0 0.0
    %121 = vmatprep.subr.mxu0 0.0
    %122 = vmatpush1.msra.mxu0 0.0
    %123 = vmatprep.subr.mxu0 0.0
    %124 = vmatpush1.msra.mxu0 0.0
    %125 = vmatprep.subr.mxu0 0.0
    %126 = vmatpush1.msra.mxu0 0.0
    %127 = vmatprep.subr.mxu0 0.0
    %128 = vmatpush1.msra.mxu0 0.0
    %129 = vmatprep.subr.mxu0 0.0
    %130 = vmatpush1.msra.mxu0 0.0
    %131 = vmatprep.subr.mxu0 0.0
    %132 = vmatpush1.msra.mxu0 0.0
    %133 = vmatprep.subr.mxu0 0.0
    %134 = vmatpush1.msra.mxu0 0.0
    %135 = vmatprep.subr.mxu0 0.0
    %136 = vmatpush1.msra.mxu0 0.0
    %137 = vmatprep.subr.mxu0 0.0
    %138 = vmatpush1.msra.mxu0 0.0
    %139 = vmatprep.subr.mxu0 0.0
    %140 = vmatpush1.msra.mxu0 0.0
    %141 = vmatprep.subr.mxu0 0.0
    %142 = vmatpush1.msra.mxu0 0.0
    %143 = vmatprep.subr.mxu0 0.0
    %144 = vmatpush1.msra.mxu0 0.0
    %145 = vmatprep.subr.mxu0 0.0
    %146 = vmatpush1.msra.mxu0 0.0
    %147 = vmatprep.subr.mxu0 0.0
    %148 = vmatpush1.msra.mxu0 0.0
    %149 = vmatprep.subr.mxu0 0.0
    %150 = vmatpush1.msra.mxu0 0.0
    %151 = vmatprep.subr.mxu0 0.0
    %152 = vmatpush1.msra.mxu0 0.0
    %153 = vmatprep.subr.mxu0 0.0
    %154 = vmatpush1.msra.mxu0 0.0
    %155 = vmatprep.subr.mxu0 0.0
    %156 = vmatpush1.msra.mxu0 0.0
    %157 = vmatprep.subr.mxu0 0.0
    %158 = vmatpush1.msra.mxu0 0.0
    %159 = vmatprep.subr.mxu0 0.0
    %160 = vmatpush1.msra.mxu0 0.0
    %161 = vmatprep.subr.mxu0 0.0
    %162 = vmatpush1.msra.mxu0 0.0
    %163 = vmatprep.subr.mxu0 0.0
    %164 = vmatpush1.msra.mxu0 0.0
    %165 = vmatprep.mubr.f32.mxu0 0.0
    %166 = vmatmul.mubr.f32.gmra.mrb[0].mxu0 %v97
    %v167 = vpop.f32.mrb[0].mxu0
    %v168 = vadd.f32 %v89, %v167
    %v169 = vpop.f32.mrb[0].mxu0
    %v170 = vadd.f32 %v89, %v169
    %171 = vmatprep.mubr.f32.mxu0 0.0
    %172 = vmatmul.mubr.f32.gmra.mrb[0].mxu0 %v99
    %v173 = vpop.f32.mrb[0].mxu0
    %v174 = vadd.f32 %v94, %v173
    %v175 = vpop.f32.mrb[0].mxu0
    %v176 = vadd.f32 %v94, %v175
    %177 = vdwg.mxu0
    %178 = vmatprep.subr.mxu0 %v85
    %179 = vmatpush1.msra.mxu0 %v84
    %180 = vmatprep.subr.mxu0 0.0
    %181 = vmatpush1.msra.mxu0 0.0
    %182 = vmatprep.subr.mxu0 0.0
    %183 = vmatpush1.msra.mxu0 0.0
    %184 = vmatprep.subr.mxu0 0.0
    %185 = vmatpush1.msra.mxu0 0.0
    %186 = vmatprep.subr.mxu0 0.0
    %187 = vmatpush1.msra.mxu0 0.0
    %188 = vmatprep.subr.mxu0 0.0
    %189 = vmatpush1.msra.mxu0 0.0
    %190 = vmatprep.subr.mxu0 0.0
    %191 = vmatpush1.msra.mxu0 0.0
    %192 = vmatprep.subr.mxu0 0.0
    %193 = vmatpush1.msra.mxu0 0.0
    %194 = vmatprep.subr.mxu0 0.0
    %195 = vmatpush1.msra.mxu0 0.0
    %196 = vmatprep.subr.mxu0 0.0
    %197 = vmatpush1.msra.mxu0 0.0
    %198 = vmatprep.subr.mxu0 0.0
    %199 = vmatpush1.msra.mxu0 0.0
    %200 = vmatprep.subr.mxu0 0.0
    %201 = vmatpush1.msra.mxu0 0.0
    %202 = vmatprep.subr.mxu0 0.0
    %203 = vmatpush1.msra.mxu0 0.0
    %204 = vmatprep.subr.mxu0 0.0
    %205 = vmatpush1.msra.mxu0 0.0
    %206 = vmatprep.subr.mxu0 0.0
    %207 = vmatpush1.msra.mxu0 0.0
    %208 = vmatprep.subr.mxu0 0.0
    %209 = vmatpush1.msra.mxu0 0.0
    %210 = vmatprep.subr.mxu0 0.0
    %211 = vmatpush1.msra.mxu0 0.0
    %212 = vmatprep.subr.mxu0 0.0
    %213 = vmatpush1.msra.mxu0 0.0
    %214 = vmatprep.subr.mxu0 0.0
    %215 = vmatpush1.msra.mxu0 0.0
    %216 = vmatprep.subr.mxu0 0.0
    %217 = vmatpush1.msra.mxu0 0.0
    %218 = vmatprep.subr.mxu0 0.0
    %219 = vmatpush1.msra.mxu0 0.0
    %220 = vmatprep.subr.mxu0 0.0
    %221 = vmatpush1.msra.mxu0 0.0
    %222 = vmatprep.subr.mxu0 0.0
    %223 = vmatpush1.msra.mxu0 0.0
    %224 = vmatprep.subr.mxu0 0.0
    %225 = vmatpush1.msra.mxu0 0.0
    %226 = vmatprep.subr.mxu0 0.0
    %227 = vmatpush1.msra.mxu0 0.0
    %228 = vmatprep.subr.mxu0 0.0
    %229 = vmatpush1.msra.mxu0 0.0
    %230 = vmatprep.subr.mxu0 0.0
    %231 = vmatpush1.msra.mxu0 0.0
    %232 = vmatprep.subr.mxu0 0.0
    %233 = vmatpush1.msra.mxu0 0.0
    %234 = vmatprep.subr.mxu0 0.0
    %235 = vmatpush1.msra.mxu0 0.0
    %236 = vmatprep.subr.mxu0 0.0
    %237 = vmatpush1.msra.mxu0 0.0
    %238 = vmatprep.subr.mxu0 0.0
    %239 = vmatpush1.msra.mxu0 0.0
    %240 = vmatprep.subr.mxu0 0.0
    %241 = vmatpush1.msra.mxu0 0.0
    %242 = vmatprep.mubr.f32.mxu0 0.0
    %243 = vmatmul.mubr.f32.gmra.mrb[0].mxu0 %v97
    %v244 = vpop.f32.mrb[0].mxu0
    %v245 = vadd.f32 %v89, %v244
    %v246 = vpop.f32.mrb[0].mxu0
    %v247 = vadd.f32 %v89, %v246
    %248 = vmatprep.mubr.f32.mxu0 0.0
    %249 = vmatmul.mubr.f32.gmra.mrb[0].mxu0 %v99
    %v250 = vpop.f32.mrb[0].mxu0
    %v251 = vadd.f32 %v94, %v250
    %v252 = vpop.f32.mrb[0].mxu0
    %v253 = vadd.f32 %v94, %v252
    %254 = vdwg.mxu0
    %255 = vst [vmem:[#allocation9] sm:$0xff] %v168
    %256 = vst [vmem:[#allocation9 + $0x8] sm:$0xff] %v170
    %257 = vst [vmem:[#allocation10] sm:$0xff] %v174
    %258 = vst [vmem:[#allocation10 + $0x8] sm:$0xff] %v176
    %s259 = scalar_lea.vmem [#allocation9], 16
    %260 = vst [vmem:[%s259] sm:$0xff] %v245
    %261 = vst [vmem:[%s259 + $0x8] sm:$0xff] %v247
    %s262 = scalar_lea.vmem [#allocation10], 16
    %263 = vst [vmem:[%s262] sm:$0xff] %v251
    %264 = vst [vmem:[%s262 + $0x8] sm:$0xff] %v253
    // Predicated region
    $region22: #{tpu_custom_call.1} parent=1 // pred_check
      _
    $region23: #{tpu_custom_call.1} parent=1 // pred_check_branch
      %266 = sbr.rel (0) target = $region25
    $region24: #{tpu_custom_call.1} parent=1 // pred_region
      %s268 = ssub.s32 512, 512
      %269 = vsyncadd [#allocation6], %s268
      %s270 = sshll.u32 [#allocation9], 4
      %s271 = int_to_ptr.vmem [resolvable:$true] %s270
      %276 = dma.vmem_to_hbm [thread:$0]  %s271, 512, %s3, [#allocation6], 256, 256, 16
    $region25: #{tpu_custom_call.1} parent=1 // pred_fallthru
      _
    // Predicated region
    $region26: #{tpu_custom_call.1} parent=1 // pred_check
      _
    $region27: #{tpu_custom_call.1} parent=1 // pred_check_branch
      %278 = sbr.rel (0) target = $region29
    $region28: #{tpu_custom_call.1} parent=1 // pred_region
      %s280 = ssub.s32 512, 512
      %281 = vsyncadd [#allocation11], %s280
      %s282 = sshll.u32 [#allocation10], 4
      %s283 = int_to_ptr.vmem [resolvable:$true] %s282
      %288 = dma.vmem_to_hbm [thread:$0]  %s283, 512, %s4, [#allocation11], 256, 256, 16
    $region29: #{tpu_custom_call.1} parent=1 // pred_fallthru
      _
    // Predicated region
    $region30: #{tpu_custom_call.1} parent=1 // pred_check
      _
    $region31: #{tpu_custom_call.1} parent=1 // pred_check_branch
      %290 = sbr.rel (0) target = $region33
    $region32: #{tpu_custom_call.1} parent=1 // pred_region
      %291 = dma.done [#allocation6], 512
    $region33: #{tpu_custom_call.1} parent=1 // pred_fallthru
      _
    // Predicated region
    $region34: #{tpu_custom_call.1} parent=1 // pred_check
      _
    $region35: #{tpu_custom_call.1} parent=1 // pred_check_branch
      %293 = sbr.rel (0) target = $region37
    $region36: #{tpu_custom_call.1} parent=1 // pred_region
      %294 = dma.done [#allocation11], 512
    $region37: #{tpu_custom_call.1} parent=1 // pred_fallthru
      _
    %295 = vsyncpa [#allocation5], 1
    %296 = vsyncpa [#allocation8], 1
    %297 = vsyncpa [#allocation6], 1
    %298 = vsyncpa [#allocation11], 1

</llo_original>
